<compile_context>
chip_gen: v5e
topology: v5e:2x2
jax: 0.10.0
libtpu: 0.0.40
codegen_flags: <defaults>
</compile_context>

<pallas_src>
import jax
import jax.numpy as jnp
from jax.experimental import pallas as pl
from jax.experimental.pallas import tpu as pltpu

EMBEDDING_DIM = 512


def _gnet_kernel(x1_ref, x2_ref, wa_ref, wb_ref, b_ref, o_ref):
    # x1_ref, x2_ref : (tb, D)   f32 activation tiles
    # wa_ref, wb_ref : (D, tn)   bf16 Wa^T / Wb^T column slices (resident)
    # b_ref          : (1, tn)   f32 fused bias (2*ba + bb) slice
    # o_ref          : (tb, tn)  output tile
    x1 = x1_ref[...]
    x2 = x2_ref[...]
    s = (x1 + x2).astype(jnp.bfloat16)   # feeds linear1a(X1) + linear1a(X2)
    p = (x1 * x2).astype(jnp.bfloat16)   # feeds linear1b(X1 * X2)
    acc = jnp.dot(s, wa_ref[...], preferred_element_type=jnp.float32)
    acc = acc + jnp.dot(p, wb_ref[...], preferred_element_type=jnp.float32)
    o_ref[...] = (acc + b_ref[...]).astype(o_ref.dtype)


def gnet_forward(x1, x2, wa, ba, wb, bb, *, tile_b=512):
    """x1, x2: (B, D). wa, wb: (D_out, D_in) like nn.Linear. ba, bb: (D,)."""
    B, D = x1.shape
    assert D == EMBEDDING_DIM
    assert wa.shape == (D, D) and wb.shape == (D, D)

    # Pre-transposed bf16 weights (native MXU dtype); f32 accumulation in-kernel.
    wa_t = wa.T.astype(jnp.bfloat16)
    wb_t = wb.T.astype(jnp.bfloat16)
    # Fused bias 2*ba + bb, kept f32 (added after f32 accumulation).
    b_fused = (2.0 * ba + bb).reshape(1, D).astype(jnp.float32)

    # ---- Batch tiling -------------------------------------------------------
    # Align rows to 8 sublanes; prefer splitting the BATCH axis across cores
    # (weights stay resident per core).  Tiny batches keep a single batch tile.
    b_align = ((B + 7) // 8) * 8
    n_b_tiles = max(1, pl.cdiv(b_align, tile_b))
    if n_b_tiles == 1 and b_align >= 256:
        n_b_tiles = 2                      # mid-size B: give both TCs a batch half
    tb = ((pl.cdiv(b_align, n_b_tiles) + 7) // 8) * 8
    b_pad = n_b_tiles * tb
    if b_pad != B:
        pad = b_pad - B
        x1 = jnp.pad(x1, ((0, pad), (0, 0)))
        x2 = jnp.pad(x2, ((0, pad), (0, 0)))

    # ---- Output-column tiling -----------------------------------------------
    # Large-B path: tn = D so the weight block index is constant -> resident.
    # Single tiny batch tile: split D_out in two (activations are then the
    # constant-index block, so still no re-fetch) to engage both v7x cores.
    if n_b_tiles == 1 and D % 256 == 0:
        tn = 256
    else:
        tn = D
    n_n_tiles = D // tn

    grid = (n_b_tiles, n_n_tiles)   # by construction, at most one axis > 1

    cost = pl.CostEstimate(
        flops=4 * b_pad * D * D,                 # two (b_pad,D)@(D,D) matmuls
        transcendentals=0,
        bytes_accessed=3 * b_pad * D * 4         # x1, x2, out (f32), fetched once
        + 2 * D * D * 2                          # bf16 Wa^T + Wb^T, fetched once
        + D * 4,                                 # fused bias
    )

    out = pl.pallas_call(
        _gnet_kernel,
        out_shape=jax.ShapeDtypeStruct((b_pad, D), x1.dtype),
        grid_spec=pltpu.PrefetchScalarGridSpec(
            num_scalar_prefetch=0,
            grid=grid,
            in_specs=[
                pl.BlockSpec((tb, D), lambda i, j: (i, 0)),   # X1 batch tile
                pl.BlockSpec((tb, D), lambda i, j: (i, 0)),   # X2 batch tile
                pl.BlockSpec((D, tn), lambda i, j: (0, j)),   # Wa^T cols (resident)
                pl.BlockSpec((D, tn), lambda i, j: (0, j)),   # Wb^T cols (resident)
                pl.BlockSpec((1, tn), lambda i, j: (0, j)),   # fused bias cols
            ],
            out_specs=pl.BlockSpec((tb, tn), lambda i, j: (i, j)),
        ),
        compiler_params=pltpu.CompilerParams(
            # No cross-step carry / scratch -> both axes are safely parallel.
            dimension_semantics=("parallel", "parallel"),
            # Headroom above v5e's 16 MiB scoped default, under v7x's 64 MiB
            # physical per-TC VMEM.
            vmem_limit_bytes=48 * 1024 * 1024,
        ),
        cost_estimate=cost,
    )(x1, x2, wa_t, wb_t, b_fused)

    if b_pad != B:
        out = out[:B]
    return out


if __name__ == "__main__":
    key = jax.random.PRNGKey(0)
    k_x1, k_x2, k_wa, k_ba, k_wb, k_bb = jax.random.split(key, 6)

    B, D = 8, EMBEDDING_DIM
    x1 = jax.random.normal(k_x1, (B, D), dtype=jnp.float32)
    x2 = jax.random.normal(k_x2, (B, D), dtype=jnp.float32)

    # Deterministic synthetic parameters (nn.Linear-like uniform init).
    bound = 1.0 / (D ** 0.5)
    wa = jax.random.uniform(k_wa, (D, D), jnp.float32, -bound, bound)
    ba = jax.random.uniform(k_ba, (D,), jnp.float32, -bound, bound)
    wb = jax.random.uniform(k_wb, (D, D), jnp.float32, -bound, bound)
    bb = jax.random.uniform(k_bb, (D,), jnp.float32, -bound, bound)

    out = gnet_forward(x1, x2, wa, ba, wb, bb)
    out = jax.block_until_ready(out)
    assert out.shape == (B, D)

    # Reference 1: same math as the kernel (bf16 operands, f32 accumulation).
    s_bf = (x1 + x2).astype(jnp.bfloat16)
    p_bf = (x1 * x2).astype(jnp.bfloat16)
    ref_bf16 = (
        jnp.dot(s_bf, wa.T.astype(jnp.bfloat16), preferred_element_type=jnp.float32)
        + jnp.dot(p_bf, wb.T.astype(jnp.bfloat16), preferred_element_type=jnp.float32)
        + (2.0 * ba + bb)
    )
    assert jnp.allclose(out, ref_bf16, atol=1e-2, rtol=1e-2), "mismatch vs bf16 reference"

    # Reference 2: full-f32 PyTorch forward (loose check — bf16 quantization).
    # TODO(synk): bf16 matmul operands are a deliberate precision trade-off vs
    # the f32 PyTorch module; accumulation stays f32.
    ref_f32 = (x1 @ wa.T + ba) + (x2 @ wa.T + ba) + ((x1 * x2) @ wb.T + bb)
    assert jnp.allclose(out, ref_f32, atol=1e-1, rtol=1e-1), "mismatch vs f32 reference"

    print("KERNEL_OK")
</pallas_src>

<mosaic_0001>
module attributes {stable_mosaic.version = 11 : i64} {
  func.func @_gnet_kernel(%arg0: i32, %arg1: i32, %arg2: memref<8x512xf32, #tpu.memory_space<vmem>>, %arg3: memref<8x512xf32, #tpu.memory_space<vmem>>, %arg4: memref<512x256xbf16, #tpu.memory_space<vmem>>, %arg5: memref<512x256xbf16, #tpu.memory_space<vmem>>, %arg6: memref<1x256xf32, #tpu.memory_space<vmem>>, %arg7: memref<8x256xf32, #tpu.memory_space<vmem>>) attributes {dimension_semantics = [#tpu.dimension_semantics<parallel>, #tpu.dimension_semantics<parallel>], iteration_bounds = array<i64: 1, 2>, scalar_prefetch = 0 : i64, scratch_operands = 0 : i64, tpu.core_type = #tpu.core_type<tc>, window_params = [{transform_indices = @transform_0, window_bounds = array<i64: 8, 512>}, {transform_indices = @transform_1, window_bounds = array<i64: 8, 512>}, {transform_indices = @transform_2, window_bounds = array<i64: 512, 256>}, {transform_indices = @transform_3, window_bounds = array<i64: 512, 256>}, {transform_indices = @transform_4, window_bounds = array<i64: 1, 256>}, {transform_indices = @transform_5, window_bounds = array<i64: 8, 256>}]} {
    %c0 = arith.constant 0 : index
    %c0_0 = arith.constant 0 : index
    %0 = vector.load %arg2[%c0, %c0_0] : memref<8x512xf32, #tpu.memory_space<vmem>>, vector<8x512xf32>
    %c0_1 = arith.constant 0 : index
    %c0_2 = arith.constant 0 : index
    %1 = vector.load %arg3[%c0_1, %c0_2] : memref<8x512xf32, #tpu.memory_space<vmem>>, vector<8x512xf32>
    %2 = arith.addf %0, %1 : vector<8x512xf32>
    %3 = arith.truncf %2 : vector<8x512xf32> to vector<8x512xbf16>
    %4 = arith.mulf %0, %1 : vector<8x512xf32>
    %5 = arith.truncf %4 : vector<8x512xf32> to vector<8x512xbf16>
    %c0_3 = arith.constant 0 : index
    %c0_4 = arith.constant 0 : index
    %6 = vector.load %arg4[%c0_3, %c0_4] : memref<512x256xbf16, #tpu.memory_space<vmem>>, vector<512x256xbf16>
    %cst = arith.constant dense<0.000000e+00> : vector<8x256xf32>
    %7 = tpu.matmul %3, %6, %cst {dimension_numbers = #tpu.dot_dimension_numbers<[1], [0], [0], [1], [0, 0, 1, 1], [], []>} : vector<8x512xbf16>, vector<512x256xbf16>, vector<8x256xf32> -> vector<8x256xf32>
    %c0_5 = arith.constant 0 : index
    %c0_6 = arith.constant 0 : index
    %8 = vector.load %arg5[%c0_5, %c0_6] : memref<512x256xbf16, #tpu.memory_space<vmem>>, vector<512x256xbf16>
    %cst_7 = arith.constant dense<0.000000e+00> : vector<8x256xf32>
    %9 = tpu.matmul %5, %8, %cst_7 {dimension_numbers = #tpu.dot_dimension_numbers<[1], [0], [0], [1], [0, 0, 1, 1], [], []>} : vector<8x512xbf16>, vector<512x256xbf16>, vector<8x256xf32> -> vector<8x256xf32>
    %10 = arith.addf %7, %9 : vector<8x256xf32>
    %c0_8 = arith.constant 0 : index
    %c0_9 = arith.constant 0 : index
    %11 = vector.load %arg6[%c0_8, %c0_9] : memref<1x256xf32, #tpu.memory_space<vmem>>, vector<1x256xf32>
    %12 = vector.broadcast %11 : vector<1x256xf32> to vector<8x256xf32>
    %13 = arith.addf %10, %12 : vector<8x256xf32>
    %c0_10 = arith.constant 0 : index
    %c0_11 = arith.constant 0 : index
    %14 = vector.load %arg7[%c0_10, %c0_11] : memref<8x256xf32, #tpu.memory_space<vmem>>, vector<8x256xf32>
    tpu.vector_store %arg7[%c0_10, %c0_11], %13 {strides = array<i32>} : memref<8x256xf32, #tpu.memory_space<vmem>>, vector<8x256xf32>,
    return
  }
  func.func @transform_0(%arg0: i32, %arg1: i32) -> (i32, i32) {
    %c0_i32 = arith.constant 0 : i32
    %c0_i32_0 = arith.constant 0 : i32
    return %arg0, %c0_i32 : i32, i32
  }
  func.func @transform_1(%arg0: i32, %arg1: i32) -> (i32, i32) {
    %c0_i32 = arith.constant 0 : i32
    %c0_i32_0 = arith.constant 0 : i32
    return %arg0, %c0_i32 : i32, i32
  }
  func.func @transform_2(%arg0: i32, %arg1: i32) -> (i32, i32) {
    %c0_i32 = arith.constant 0 : i32
    %c0_i32_0 = arith.constant 0 : i32
    return %c0_i32, %arg1 : i32, i32
  }
  func.func @transform_3(%arg0: i32, %arg1: i32) -> (i32, i32) {
    %c0_i32 = arith.constant 0 : i32
    %c0_i32_0 = arith.constant 0 : i32
    return %c0_i32, %arg1 : i32, i32
  }
  func.func @transform_4(%arg0: i32, %arg1: i32) -> (i32, i32) {
    %c0_i32 = arith.constant 0 : i32
    %c0_i32_0 = arith.constant 0 : i32
    return %c0_i32, %arg1 : i32, i32
  }
  func.func @transform_5(%arg0: i32, %arg1: i32) -> (i32, i32) {
    %c0_i32 = arith.constant 0 : i32
    return %arg0, %arg1 : i32, i32
  }
}

</mosaic_0001>

<llo_original>
// kernel: tpu_custom_call.1
$region0: #{tpu_custom_call.1}
  #allocation0 [shape = 'u32[]', space=smem, size = 0x4, offset = 0x4, fixed_abs, tag = 'smem constant byte address 0x4 - core index']
  #allocation1 [shape = 'u32[72,128]{1,0:T(1,128)}', space=vmem, size = 0x9000, scoped, tag = 'internal scratch']
  %s0 = inlined_call_operand.hbm [shape: f32[8,512], index: 0, kind: input, shape index: {}]
  %s1 = inlined_call_operand.hbm [shape: f32[8,512], index: 1, kind: input, shape index: {}]
  %s2 = inlined_call_operand.hbm [shape: bf16[512,512], index: 2, kind: input, shape index: {}]
  %s3 = inlined_call_operand.hbm [shape: bf16[512,512], index: 3, kind: input, shape index: {}]
  %s4 = inlined_call_operand.hbm [shape: f32[1,512], index: 4, kind: input, shape index: {}]
  %s5 = inlined_call_operand.hbm [shape: f32[8,512], index: 5, kind: output, shape index: {}]
  %s6 = sld [smem:[#allocation0]]
  $region73: #{tpu_custom_call.1} parent=0
    _
  %s8 = ssub.s32 1, %s6
  %s9 = scalar_select 0, %s8, %s6
  $region1: #{tpu_custom_call.1} parent=0
    #allocation2 [shape = 'u8[16384]{0}', space=vmem, size = 0x4000, scoped, tag = 'input window, operand 0, single buffered']
    #allocation3 [shape = 's32[2]{0}', space=sflag, size = 0x8, scoped, tag = 'scoped memory for tpu_custom_call.1']
    #allocation4 [shape = 's32[2]{0}', space=sflag, size = 0x8, scoped, tag = 'scoped memory for tpu_custom_call.1']
    #allocation5 [shape = 'u8[16384]{0}', space=vmem, size = 0x4000, scoped, tag = 'input window, operand 1, single buffered']
    #allocation6 [shape = 's32[1]{0}', space=sflag, size = 0x4, scoped, tag = 'scoped memory for tpu_custom_call.1']
    #allocation7 [shape = 'u8[524288]{0}', space=vmem, size = 0x80000, scoped, tag = 'input window, operand 2']
    #allocation8 [shape = 'u8[524288]{0}', space=vmem, size = 0x80000, scoped, tag = 'input window, operand 3']
    #allocation9 [shape = 'u8[2048]{0}', space=vmem, size = 0x800, scoped, tag = 'input window, operand 4']
    #allocation10 [shape = 'u8[16384]{0}', space=vmem, size = 0x4000, scoped, tag = 'output window, operand 0']
    %10 = vsyncpa [#allocation3], 0
    %11 = vsyncpa [#allocation6], 0
    %12 = vsyncpa [#allocation4], 0
    %s13 = scalar_lea.sflag [#allocation4], 1
    %14 = vsyncpa %s13, 0
    loop: start=0, step=1, limit=4
    $region2: #{tpu_custom_call.1} parent=1 // loop_pre_header
      _
    $region3: #{tpu_custom_call.1} parent=1 // loop_header
      %s16 = sphi 0, %s20
      %p17 = scmp.ge.s32.totalorder %s16, 4
      %s23 = sphi 0, %s35
      %s24 = sphi 0, %s31
      %s25 = sphi 0, %s23
      %s26 = sphi 0, %s24
      %s27 = sphi 0, %s25
      %s28 = sphi 0, %s26
      %s38 = sphi 0, %s40
      %s41 = sphi 0, %s38
      %s42 = sphi 0, %s41
      %s58 = sphi 0, %s42
      %s64 = sphi 0, %s66
      %s67 = sphi 0, %s64
      %s68 = sphi 0, %s67
      %s84 = sphi 0, %s68
      %s90 = sphi 0, %s92
      %s93 = sphi 0, %s90
      %s94 = sphi 0, %s93
      %s110 = sphi 0, %s94
      %s116 = sphi 0, %s118
      %s119 = sphi 0, %s116
      %s120 = sphi 0, %s119
      %s136 = sphi 0, %s120
      %s142 = sphi 0, %s144
      %s145 = sphi 0, %s142
      %s146 = sphi 0, %s145
      %s162 = sphi 0, %s146
      %s170 = sphi 0, %s172
      %s173 = sphi 0, %s170
      %s174 = sphi 0, %s173
      %s190 = sphi 0, %s174
    $region4: #{tpu_custom_call.1} parent=1 // loop_header_branch
      %19 = sbr.rel (%p17) target = $region8
    $region5: #{tpu_custom_call.1} parent=1 // loop_body
      %s21 = ssub.s32 %s16, 1
      %s22 = ssub.s32 %s16, 2
      %s29 = sadd.s32 1, %s24
      %p30 = scmp.ge.s32.totalorder %s29, 2
      %s31 = scalar_select %p30, 0, %s29
      %s32 = sadd.s32 1, %s23
      %s33 = scalar_select %p30, %s32, %s23
      %p34 = scmp.ge.s32.totalorder %s33, 1
      %s35 = scalar_select %p34, 0, %s33
      %s36 = ssub.s32 %s23, %s35
      %p37 = scmp.eq.s32.totalorder %s36, 0
      %s39 = sadd.s32 %s38, 1
      %s40 = scalar_select %p37, %s38, %s39
      %p43 = pneg %p37
      %p44 = scmp.eq.s32.totalorder %s16, 1
      %p45 = por %p43, %p44
      %p46 = scmp.ne.s32.totalorder %s38, %s41
      %p47 = scmp.eq.s32.totalorder %s16, 0
      %p48 = por %p46, %p47
      %p49 = scmp.ne.s32.totalorder %s38, %s41
      %p50 = scmp.eq.s32.totalorder %s21, 1
      %p51 = por %p49, %p50
      %p52 = scmp.ne.s32.totalorder %s41, %s42
      %p53 = scmp.eq.s32.totalorder %s21, 0
      %p54 = por %p52, %p53
      %p55 = scmp.ne.s32.totalorder %s41, %s42
      %p56 = scmp.eq.s32.totalorder %s22, 1
      %p57 = por %p55, %p56
      %p59 = scmp.ne.s32.totalorder %s42, %s58
      %p60 = scmp.eq.s32.totalorder %s22, 0
      %p61 = por %p59, %p60
      %s62 = ssub.s32 %s23, %s35
      %p63 = scmp.eq.s32.totalorder %s62, 0
      %s65 = sadd.s32 %s64, 1
      %s66 = scalar_select %p63, %s64, %s65
      %p69 = pneg %p63
      %p70 = scmp.eq.s32.totalorder %s16, 1
      %p71 = por %p69, %p70
      %p72 = scmp.ne.s32.totalorder %s64, %s67
      %p73 = scmp.eq.s32.totalorder %s16, 0
      %p74 = por %p72, %p73
      %p75 = scmp.ne.s32.totalorder %s64, %s67
      %p76 = scmp.eq.s32.totalorder %s21, 1
      %p77 = por %p75, %p76
      %p78 = scmp.ne.s32.totalorder %s67, %s68
      %p79 = scmp.eq.s32.totalorder %s21, 0
      %p80 = por %p78, %p79
      %p81 = scmp.ne.s32.totalorder %s67, %s68
      %p82 = scmp.eq.s32.totalorder %s22, 1
      %p83 = por %p81, %p82
      %p85 = scmp.ne.s32.totalorder %s68, %s84
      %p86 = scmp.eq.s32.totalorder %s22, 0
      %p87 = por %p85, %p86
      %s88 = ssub.s32 %s24, %s31
      %p89 = scmp.eq.s32.totalorder %s88, 0
      %s91 = sadd.s32 %s90, 1
      %s92 = scalar_select %p89, %s90, %s91
      %p95 = pneg %p89
      %p96 = scmp.eq.s32.totalorder %s16, 1
      %p97 = por %p95, %p96
      %p98 = scmp.ne.s32.totalorder %s90, %s93
      %p99 = scmp.eq.s32.totalorder %s16, 0
      %p100 = por %p98, %p99
      %p101 = scmp.ne.s32.totalorder %s90, %s93
      %p102 = scmp.eq.s32.totalorder %s21, 1
      %p103 = por %p101, %p102
      %p104 = scmp.ne.s32.totalorder %s93, %s94
      %p105 = scmp.eq.s32.totalorder %s21, 0
      %p106 = por %p104, %p105
      %p107 = scmp.ne.s32.totalorder %s93, %s94
      %p108 = scmp.eq.s32.totalorder %s22, 1
      %p109 = por %p107, %p108
      %p111 = scmp.ne.s32.totalorder %s94, %s110
      %p112 = scmp.eq.s32.totalorder %s22, 0
      %p113 = por %p111, %p112
      %s114 = ssub.s32 %s24, %s31
      %p115 = scmp.eq.s32.totalorder %s114, 0
      %s117 = sadd.s32 %s116, 1
      %s118 = scalar_select %p115, %s116, %s117
      %p121 = pneg %p115
      %p122 = scmp.eq.s32.totalorder %s16, 1
      %p123 = por %p121, %p122
      %p124 = scmp.ne.s32.totalorder %s116, %s119
      %p125 = scmp.eq.s32.totalorder %s16, 0
      %p126 = por %p124, %p125
      %p127 = scmp.ne.s32.totalorder %s116, %s119
      %p128 = scmp.eq.s32.totalorder %s21, 1
      %p129 = por %p127, %p128
      %p130 = scmp.ne.s32.totalorder %s119, %s120
      %p131 = scmp.eq.s32.totalorder %s21, 0
      %p132 = por %p130, %p131
      %p133 = scmp.ne.s32.totalorder %s119, %s120
      %p134 = scmp.eq.s32.totalorder %s22, 1
      %p135 = por %p133, %p134
      %p137 = scmp.ne.s32.totalorder %s120, %s136
      %p138 = scmp.eq.s32.totalorder %s22, 0
      %p139 = por %p137, %p138
      %s140 = ssub.s32 %s24, %s31
      %p141 = scmp.eq.s32.totalorder %s140, 0
      %s143 = sadd.s32 %s142, 1
      %s144 = scalar_select %p141, %s142, %s143
      %p147 = pneg %p141
      %p148 = scmp.eq.s32.totalorder %s16, 1
      %p149 = por %p147, %p148
      %p150 = scmp.ne.s32.totalorder %s142, %s145
      %p151 = scmp.eq.s32.totalorder %s16, 0
      %p152 = por %p150, %p151
      %p153 = scmp.ne.s32.totalorder %s142, %s145
      %p154 = scmp.eq.s32.totalorder %s21, 1
      %p155 = por %p153, %p154
      %p156 = scmp.ne.s32.totalorder %s145, %s146
      %p157 = scmp.eq.s32.totalorder %s21, 0
      %p158 = por %p156, %p157
      %p159 = scmp.ne.s32.totalorder %s145, %s146
      %p160 = scmp.eq.s32.totalorder %s22, 1
      %p161 = por %p159, %p160
      %p163 = scmp.ne.s32.totalorder %s146, %s162
      %p164 = scmp.eq.s32.totalorder %s22, 0
      %p165 = por %p163, %p164
      %s166 = ssub.s32 %s23, %s35
      %s167 = ssub.s32 %s24, %s31
      %s168 = sor.u32 %s166, %s167
      %p169 = scmp.eq.s32.totalorder %s168, 0
      %s171 = sadd.s32 %s170, 1
      %s172 = scalar_select %p169, %s170, %s171
      %p175 = pneg %p169
      %p176 = scmp.eq.s32.totalorder %s16, 1
      %p177 = por %p175, %p176
      %p178 = scmp.ne.s32.totalorder %s170, %s173
      %p179 = scmp.eq.s32.totalorder %s16, 0
      %p180 = por %p178, %p179
      %p181 = scmp.ne.s32.totalorder %s170, %s173
      %p182 = scmp.eq.s32.totalorder %s21, 1
      %p183 = por %p181, %p182
      %p184 = scmp.ne.s32.totalorder %s173, %s174
      %p185 = scmp.eq.s32.totalorder %s21, 0
      %p186 = por %p184, %p185
      %p187 = scmp.ne.s32.totalorder %s173, %s174
      %p188 = scmp.eq.s32.totalorder %s22, 1
      %p189 = por %p187, %p188
      %p191 = scmp.ne.s32.totalorder %s174, %s190
      %p192 = scmp.eq.s32.totalorder %s22, 0
      %p193 = por %p191, %p192
      %p194 = scmp.le.s32.totalorder 1, %s16
      %p195 = scmp.lt.s32.totalorder %s16, 3
      %p196 = pnand %p194, %p195
      %p197 = pneg %p196
      // Predicated region
      $region9: #{tpu_custom_call.1} parent=5 // pred_check
        _
      $region10: #{tpu_custom_call.1} parent=5 // pred_check_branch
        %199 = sbr.rel (%p196) target = $region12
      $region11: #{tpu_custom_call.1} parent=5 // pred_region
        %s200 = ssub.s32 %s16, 1
        // Predicated region
        $region13: #{tpu_custom_call.1} parent=11 // pred_check
          %p201 = pneg %p54
        $region14: #{tpu_custom_call.1} parent=11 // pred_check_branch
          %203 = sbr.rel (%p201) target = $region16
        $region15: #{tpu_custom_call.1} parent=11 // pred_region
          %205 = vsyncadd [#allocation3], 0
          %s206 = smul.addr %s25, 4
          %s207 = smul.addr %s206, 8
          %s208 = scalar_lea.hbm %s0, %s207
          %s210 = sshll.u32 %s208, 4
          %s211 = int_to_ptr.hbm [resolvable:$true] %s210
          %s212 = sshll.u32 [#allocation2], 4
          %s213 = int_to_ptr.vmem [resolvable:$true] %s212
          %215 = dma.hbm_to_vmem [thread:$0]  %s211, 512, %s213, [#allocation3]
        $region16: #{tpu_custom_call.1} parent=11 // pred_fallthru
          _
        // Predicated region
        $region17: #{tpu_custom_call.1} parent=11 // pred_check
          %p216 = pneg %p80
        $region18: #{tpu_custom_call.1} parent=11 // pred_check_branch
          %218 = sbr.rel (%p216) target = $region20
        $region19: #{tpu_custom_call.1} parent=11 // pred_region
          %220 = vsyncadd [#allocation6], 0
          %s221 = smul.addr %s25, 4
          %s222 = smul.addr %s221, 8
          %s223 = scalar_lea.hbm %s1, %s222
          %s225 = sshll.u32 %s223, 4
          %s226 = int_to_ptr.hbm [resolvable:$true] %s225
          %s227 = sshll.u32 [#allocation5], 4
          %s228 = int_to_ptr.vmem [resolvable:$true] %s227
          %230 = dma.hbm_to_vmem [thread:$0]  %s226, 512, %s228, [#allocation6]
        $region20: #{tpu_custom_call.1} parent=11 // pred_fallthru
          _
      $region12: #{tpu_custom_call.1} parent=5 // pred_fallthru
        _
      %p231 = scmp.lt.s32.totalorder %s16, 2
      // Predicated region
      $region21: #{tpu_custom_call.1} parent=5 // pred_check
        %p232 = pneg %p231
      $region22: #{tpu_custom_call.1} parent=5 // pred_check_branch
        %234 = sbr.rel (%p232) target = $region24
      $region23: #{tpu_custom_call.1} parent=5 // pred_region
        // Predicated region
        $region25: #{tpu_custom_call.1} parent=23 // pred_check
          %p235 = pneg %p100
        $region26: #{tpu_custom_call.1} parent=23 // pred_check_branch
          %237 = sbr.rel (%p235) target = $region28
        $region27: #{tpu_custom_call.1} parent=23 // pred_region
          %s238 = sand.u32 %s16, 1
          %s239 = scalar_lea.sflag [#allocation3], %s238
          %s240 = sand.u32 %s90, 1
          %s241 = smul.addr %s240, 512
          %s242 = scalar_lea.vmem [#allocation7], %s241
          %s243 = smul.u32 2, %s24
          %245 = vsyncadd %s239, 0
          %s246 = smul.addr %s243, 4
          %s247 = scalar_lea.hbm %s2, %s246
          %s248 = sshll.u32 %s247, 4
          %s249 = int_to_ptr.hbm [resolvable:$true] %s248
          %s250 = sshll.u32 %s242, 4
          %s251 = int_to_ptr.vmem [resolvable:$true] %s250
          %256 = dma.hbm_to_vmem [thread:$0]  %s249, 8192, %s251, %s239, 256, 128, 8
        $region28: #{tpu_custom_call.1} parent=23 // pred_fallthru
          _
        // Predicated region
        $region29: #{tpu_custom_call.1} parent=23 // pred_check
          %p257 = pneg %p126
        $region30: #{tpu_custom_call.1} parent=23 // pred_check_branch
          %259 = sbr.rel (%p257) target = $region32
        $region31: #{tpu_custom_call.1} parent=23 // pred_region
          %s260 = sand.u32 %s16, 1
          %s261 = scalar_lea.sflag [#allocation3], %s260
          %s262 = sand.u32 %s116, 1
          %s263 = smul.addr %s262, 512
          %s264 = scalar_lea.vmem [#allocation8], %s263
          %s265 = smul.u32 2, %s24
          %267 = vsyncadd %s261, 0
          %s268 = smul.addr %s265, 4
          %s269 = scalar_lea.hbm %s3, %s268
          %s270 = sshll.u32 %s269, 4
          %s271 = int_to_ptr.hbm [resolvable:$true] %s270
          %s272 = sshll.u32 %s264, 4
          %s273 = int_to_ptr.vmem [resolvable:$true] %s272
          %278 = dma.hbm_to_vmem [thread:$0]  %s271, 8192, %s273, %s261, 256, 128, 8
        $region32: #{tpu_custom_call.1} parent=23 // pred_fallthru
          _
        // Predicated region
        $region33: #{tpu_custom_call.1} parent=23 // pred_check
          %p279 = pneg %p152
        $region34: #{tpu_custom_call.1} parent=23 // pred_check_branch
          %281 = sbr.rel (%p279) target = $region36
        $region35: #{tpu_custom_call.1} parent=23 // pred_region
          %s282 = sand.u32 %s16, 1
          %s283 = scalar_lea.sflag [#allocation3], %s282
          %s284 = sand.u32 %s142, 1
          %s285 = smul.addr %s284, 2
          %s286 = scalar_lea.vmem [#allocation9], %s285
          %s287 = smul.u32 2, %s24
          %289 = vsyncadd %s283, 0
          %s290 = scalar_lea.hbm %s4, %s287
          %s292 = sshll.u32 %s290, 4
          %s293 = int_to_ptr.hbm [resolvable:$true] %s292
          %s294 = sshll.u32 %s286, 4
          %s295 = int_to_ptr.vmem [resolvable:$true] %s294
          %297 = dma.hbm_to_vmem [thread:$0]  %s293, 32, %s295, %s283
        $region36: #{tpu_custom_call.1} parent=23 // pred_fallthru
          _
      $region24: #{tpu_custom_call.1} parent=5 // pred_fallthru
        _
      %p298 = scmp.le.s32.totalorder 1, %s16
      %p299 = scmp.lt.s32.totalorder %s16, 3
      %p300 = pnand %p298, %p299
      %p301 = pneg %p300
      // Predicated region
      $region37: #{tpu_custom_call.1} parent=5 // pred_check
        _
      $region38: #{tpu_custom_call.1} parent=5 // pred_check_branch
        %303 = sbr.rel (%p300) target = $region40
      $region39: #{tpu_custom_call.1} parent=5 // pred_region
        %s304 = ssub.s32 %s16, 1
        // Predicated region
        $region41: #{tpu_custom_call.1} parent=39 // pred_check
          %p305 = pneg %p54
        $region42: #{tpu_custom_call.1} parent=39 // pred_check_branch
          %307 = sbr.rel (%p305) target = $region44
        $region43: #{tpu_custom_call.1} parent=39 // pred_region
          %309 = dma.done [#allocation3], 512
        $region44: #{tpu_custom_call.1} parent=39 // pred_fallthru
          _
        // Predicated region
        $region45: #{tpu_custom_call.1} parent=39 // pred_check
          %p310 = pneg %p80
        $region46: #{tpu_custom_call.1} parent=39 // pred_check_branch
          %312 = sbr.rel (%p310) target = $region48
        $region47: #{tpu_custom_call.1} parent=39 // pred_region
          %314 = dma.done [#allocation6], 512
        $region48: #{tpu_custom_call.1} parent=39 // pred_fallthru
          _
        %s315 = sand.u32 %s21, 1
        %s316 = scalar_lea.sflag [#allocation3], %s315
        %s317 = sand.u32 %s93, 1
        %s318 = smul.addr %s317, 512
        %s319 = scalar_lea.vmem [#allocation7], %s318
        // Predicated region
        $region49: #{tpu_custom_call.1} parent=39 // pred_check
          %p320 = pneg %p106
        $region50: #{tpu_custom_call.1} parent=39 // pred_check_branch
          %322 = sbr.rel (%p320) target = $region52
        $region51: #{tpu_custom_call.1} parent=39 // pred_region
          %324 = dma.done %s316, 8192
        $region52: #{tpu_custom_call.1} parent=39 // pred_fallthru
          _
        %s325 = sand.u32 %s21, 1
        %s326 = scalar_lea.sflag [#allocation3], %s325
        %s327 = sand.u32 %s119, 1
        %s328 = smul.addr %s327, 512
        %s329 = scalar_lea.vmem [#allocation8], %s328
        // Predicated region
        $region53: #{tpu_custom_call.1} parent=39 // pred_check
          %p330 = pneg %p132
        $region54: #{tpu_custom_call.1} parent=39 // pred_check_branch
          %332 = sbr.rel (%p330) target = $region56
        $region55: #{tpu_custom_call.1} parent=39 // pred_region
          %334 = dma.done %s326, 8192
        $region56: #{tpu_custom_call.1} parent=39 // pred_fallthru
          _
        %s335 = sand.u32 %s21, 1
        %s336 = scalar_lea.sflag [#allocation3], %s335
        %s337 = sand.u32 %s145, 1
        %s338 = smul.addr %s337, 2
        %s339 = scalar_lea.vmem [#allocation9], %s338
        // Predicated region
        $region57: #{tpu_custom_call.1} parent=39 // pred_check
          %p340 = pneg %p158
        $region58: #{tpu_custom_call.1} parent=39 // pred_check_branch
          %342 = sbr.rel (%p340) target = $region60
        $region59: #{tpu_custom_call.1} parent=39 // pred_region
          %344 = dma.done %s336, 32
        $region60: #{tpu_custom_call.1} parent=39 // pred_fallthru
          _
        %p345 = pneg %p54
        %p346 = pneg %p51
        %p347 = pneg %p80
        %p348 = pneg %p77
        %s349 = sand.u32 %s21, 1
        %s350 = scalar_lea.sflag [#allocation3], %s349
        %s351 = sand.u32 %s93, 1
        %s352 = smul.addr %s351, 512
        %s353 = scalar_lea.vmem [#allocation7], %s352
        %p354 = pneg %p106
        %p355 = pneg %p103
        %s356 = sand.u32 %s21, 1
        %s357 = scalar_lea.sflag [#allocation3], %s356
        %s358 = sand.u32 %s119, 1
        %s359 = smul.addr %s358, 512
        %s360 = scalar_lea.vmem [#allocation8], %s359
        %p361 = pneg %p132
        %p362 = pneg %p129
        %s363 = sand.u32 %s21, 1
        %s364 = scalar_lea.sflag [#allocation3], %s363
        %s365 = sand.u32 %s145, 1
        %s366 = smul.addr %s365, 2
        %s367 = scalar_lea.vmem [#allocation9], %s366
        %p368 = pneg %p158
        %p369 = pneg %p155
        %p370 = pneg %p186
        %p371 = pneg %p183
        %s372 = sand.u32 %s173, 1
        %s373 = scalar_lea.sflag [#allocation4], %s372
        %s374 = sand.u32 %s173, 1
        %s375 = smul.addr %s374, 16
        %s376 = scalar_lea.vmem [#allocation10], %s375
        %s377 = smul.u32 2, %s26
        %s378 = smul.u32 2, %s26
        %s379 = smul.u32 2, %s26
        %s380 = smul.u32 2, %s26
        %v381 = vld [vmem:[#allocation2] sm:$0xff]
        %v382 = vld [vmem:[#allocation2 + $0x8] sm:$0xff]
        %v383 = vld [vmem:[#allocation2 + $0x10] sm:$0xff]
        %v384 = vld [vmem:[#allocation2 + $0x18] sm:$0xff]
        %v385 = vld [vmem:[#allocation5] sm:$0xff]
        %v386 = vld [vmem:[#allocation5 + $0x8] sm:$0xff]
        %v387 = vld [vmem:[#allocation5 + $0x10] sm:$0xff]
        %v388 = vld [vmem:[#allocation5 + $0x18] sm:$0xff]
        %v389 = vadd.f32 %v381, %v385
        %v390 = vadd.f32 %v382, %v386
        %v391 = vadd.f32 %v383, %v387
        %v392 = vadd.f32 %v384, %v388
        %v393 = vpack.c.bf16 %v389, %v389
        %v394 = vpack.c.bf16 %v390, %v390
        %v395 = vpack.c.bf16 %v391, %v391
        %v396 = vpack.c.bf16 %v392, %v392
        %v397 = vmul.f32 %v381, %v385
        %v398 = vmul.f32 %v382, %v386
        %v399 = vmul.f32 %v383, %v387
        %v400 = vmul.f32 %v384, %v388
        %v401 = vpack.c.bf16 %v397, %v397
        %v402 = vpack.c.bf16 %v398, %v398
        %v403 = vpack.c.bf16 %v399, %v399
        %v404 = vpack.c.bf16 %v400, %v400
        %v405 = vld [vmem:[%s319] sm:$0xff]
        %v406 = vld [vmem:[%s319 + $0x8] sm:$0xff]
        %v407 = vld [vmem:[%s319 + $0x10] sm:$0xff]
        %v408 = vld [vmem:[%s319 + $0x18] sm:$0xff]
        %v409 = vld [vmem:[%s319 + $0x20] sm:$0xff]
        %v410 = vld [vmem:[%s319 + $0x28] sm:$0xff]
        %v411 = vld [vmem:[%s319 + $0x30] sm:$0xff]
        %v412 = vld [vmem:[%s319 + $0x38] sm:$0xff]
        %v413 = vld [vmem:[%s319 + $0x40] sm:$0xff]
        %v414 = vld [vmem:[%s319 + $0x48] sm:$0xff]
        %v415 = vld [vmem:[%s319 + $0x50] sm:$0xff]
        %v416 = vld [vmem:[%s319 + $0x58] sm:$0xff]
        %v417 = vld [vmem:[%s319 + $0x60] sm:$0xff]
        %v418 = vld [vmem:[%s319 + $0x68] sm:$0xff]
        %v419 = vld [vmem:[%s319 + $0x70] sm:$0xff]
        %v420 = vld [vmem:[%s319 + $0x78] sm:$0xff]
        %v421 = vld [vmem:[%s319 + $0x80] sm:$0xff]
        %v422 = vld [vmem:[%s319 + $0x88] sm:$0xff]
        %v423 = vld [vmem:[%s319 + $0x90] sm:$0xff]
        %v424 = vld [vmem:[%s319 + $0x98] sm:$0xff]
        %v425 = vld [vmem:[%s319 + $0xa0] sm:$0xff]
        %v426 = vld [vmem:[%s319 + $0xa8] sm:$0xff]
        %v427 = vld [vmem:[%s319 + $0xb0] sm:$0xff]
        %v428 = vld [vmem:[%s319 + $0xb8] sm:$0xff]
        %v429 = vld [vmem:[%s319 + $0xc0] sm:$0xff]
        %v430 = vld [vmem:[%s319 + $0xc8] sm:$0xff]
        %v431 = vld [vmem:[%s319 + $0xd0] sm:$0xff]
        %v432 = vld [vmem:[%s319 + $0xd8] sm:$0xff]
        %v433 = vld [vmem:[%s319 + $0xe0] sm:$0xff]
        %v434 = vld [vmem:[%s319 + $0xe8] sm:$0xff]
        %v435 = vld [vmem:[%s319 + $0xf0] sm:$0xff]
        %v436 = vld [vmem:[%s319 + $0xf8] sm:$0xff]
        %v437 = vld [vmem:[%s319 + $0x100] sm:$0xff]
        %v438 = vld [vmem:[%s319 + $0x108] sm:$0xff]
        %v439 = vld [vmem:[%s319 + $0x110] sm:$0xff]
        %v440 = vld [vmem:[%s319 + $0x118] sm:$0xff]
        %v441 = vld [vmem:[%s319 + $0x120] sm:$0xff]
        %v442 = vld [vmem:[%s319 + $0x128] sm:$0xff]
        %v443 = vld [vmem:[%s319 + $0x130] sm:$0xff]
        %v444 = vld [vmem:[%s319 + $0x138] sm:$0xff]
        %v445 = vld [vmem:[%s319 + $0x140] sm:$0xff]
        %v446 = vld [vmem:[%s319 + $0x148] sm:$0xff]
        %v447 = vld [vmem:[%s319 + $0x150] sm:$0xff]
        %v448 = vld [vmem:[%s319 + $0x158] sm:$0xff]
        %v449 = vld [vmem:[%s319 + $0x160] sm:$0xff]
        %v450 = vld [vmem:[%s319 + $0x168] sm:$0xff]
        %v451 = vld [vmem:[%s319 + $0x170] sm:$0xff]
        %v452 = vld [vmem:[%s319 + $0x178] sm:$0xff]
        %v453 = vld [vmem:[%s319 + $0x180] sm:$0xff]
        %v454 = vld [vmem:[%s319 + $0x188] sm:$0xff]
        %v455 = vld [vmem:[%s319 + $0x190] sm:$0xff]
        %v456 = vld [vmem:[%s319 + $0x198] sm:$0xff]
        %v457 = vld [vmem:[%s319 + $0x1a0] sm:$0xff]
        %v458 = vld [vmem:[%s319 + $0x1a8] sm:$0xff]
        %v459 = vld [vmem:[%s319 + $0x1b0] sm:$0xff]
        %v460 = vld [vmem:[%s319 + $0x1b8] sm:$0xff]
        %v461 = vld [vmem:[%s319 + $0x1c0] sm:$0xff]
        %v462 = vld [vmem:[%s319 + $0x1c8] sm:$0xff]
        %v463 = vld [vmem:[%s319 + $0x1d0] sm:$0xff]
        %v464 = vld [vmem:[%s319 + $0x1d8] sm:$0xff]
        %v465 = vld [vmem:[%s319 + $0x1e0] sm:$0xff]
        %v466 = vld [vmem:[%s319 + $0x1e8] sm:$0xff]
        %v467 = vld [vmem:[%s319 + $0x1f0] sm:$0xff]
        %v468 = vld [vmem:[%s319 + $0x1f8] sm:$0xff]
        %v469 = vld [vmem:[%s329] sm:$0xff]
        %v470 = vld [vmem:[%s329 + $0x8] sm:$0xff]
        %v471 = vld [vmem:[%s329 + $0x10] sm:$0xff]
        %v472 = vld [vmem:[%s329 + $0x18] sm:$0xff]
        %v473 = vld [vmem:[%s329 + $0x20] sm:$0xff]
        %v474 = vld [vmem:[%s329 + $0x28] sm:$0xff]
        %v475 = vld [vmem:[%s329 + $0x30] sm:$0xff]
        %v476 = vld [vmem:[%s329 + $0x38] sm:$0xff]
        %v477 = vld [vmem:[%s329 + $0x40] sm:$0xff]
        %v478 = vld [vmem:[%s329 + $0x48] sm:$0xff]
        %v479 = vld [vmem:[%s329 + $0x50] sm:$0xff]
        %v480 = vld [vmem:[%s329 + $0x58] sm:$0xff]
        %v481 = vld [vmem:[%s329 + $0x60] sm:$0xff]
        %v482 = vld [vmem:[%s329 + $0x68] sm:$0xff]
        %v483 = vld [vmem:[%s329 + $0x70] sm:$0xff]
        %v484 = vld [vmem:[%s329 + $0x78] sm:$0xff]
        %v485 = vld [vmem:[%s329 + $0x80] sm:$0xff]
        %v486 = vld [vmem:[%s329 + $0x88] sm:$0xff]
        %v487 = vld [vmem:[%s329 + $0x90] sm:$0xff]
        %v488 = vld [vmem:[%s329 + $0x98] sm:$0xff]
        %v489 = vld [vmem:[%s329 + $0xa0] sm:$0xff]
        %v490 = vld [vmem:[%s329 + $0xa8] sm:$0xff]
        %v491 = vld [vmem:[%s329 + $0xb0] sm:$0xff]
        %v492 = vld [vmem:[%s329 + $0xb8] sm:$0xff]
        %v493 = vld [vmem:[%s329 + $0xc0] sm:$0xff]
        %v494 = vld [vmem:[%s329 + $0xc8] sm:$0xff]
        %v495 = vld [vmem:[%s329 + $0xd0] sm:$0xff]
        %v496 = vld [vmem:[%s329 + $0xd8] sm:$0xff]
        %v497 = vld [vmem:[%s329 + $0xe0] sm:$0xff]
        %v498 = vld [vmem:[%s329 + $0xe8] sm:$0xff]
        %v499 = vld [vmem:[%s329 + $0xf0] sm:$0xff]
        %v500 = vld [vmem:[%s329 + $0xf8] sm:$0xff]
        %v501 = vld [vmem:[%s329 + $0x100] sm:$0xff]
        %v502 = vld [vmem:[%s329 + $0x108] sm:$0xff]
        %v503 = vld [vmem:[%s329 + $0x110] sm:$0xff]
        %v504 = vld [vmem:[%s329 + $0x118] sm:$0xff]
        %v505 = vld [vmem:[%s329 + $0x120] sm:$0xff]
        %v506 = vld [vmem:[%s329 + $0x128] sm:$0xff]
        %v507 = vld [vmem:[%s329 + $0x130] sm:$0xff]
        %v508 = vld [vmem:[%s329 + $0x138] sm:$0xff]
        %v509 = vld [vmem:[%s329 + $0x140] sm:$0xff]
        %v510 = vld [vmem:[%s329 + $0x148] sm:$0xff]
        %v511 = vld [vmem:[%s329 + $0x150] sm:$0xff]
        %v512 = vld [vmem:[%s329 + $0x158] sm:$0xff]
        %v513 = vld [vmem:[%s329 + $0x160] sm:$0xff]
        %v514 = vld [vmem:[%s329 + $0x168] sm:$0xff]
        %v515 = vld [vmem:[%s329 + $0x170] sm:$0xff]
        %v516 = vld [vmem:[%s329 + $0x178] sm:$0xff]
        %v517 = vld [vmem:[%s329 + $0x180] sm:$0xff]
        %v518 = vld [vmem:[%s329 + $0x188] sm:$0xff]
        %v519 = vld [vmem:[%s329 + $0x190] sm:$0xff]
        %v520 = vld [vmem:[%s329 + $0x198] sm:$0xff]
        %v521 = vld [vmem:[%s329 + $0x1a0] sm:$0xff]
        %v522 = vld [vmem:[%s329 + $0x1a8] sm:$0xff]
        %v523 = vld [vmem:[%s329 + $0x1b0] sm:$0xff]
        %v524 = vld [vmem:[%s329 + $0x1b8] sm:$0xff]
        %v525 = vld [vmem:[%s329 + $0x1c0] sm:$0xff]
        %v526 = vld [vmem:[%s329 + $0x1c8] sm:$0xff]
        %v527 = vld [vmem:[%s329 + $0x1d0] sm:$0xff]
        %v528 = vld [vmem:[%s329 + $0x1d8] sm:$0xff]
        %v529 = vld [vmem:[%s329 + $0x1e0] sm:$0xff]
        %v530 = vld [vmem:[%s329 + $0x1e8] sm:$0xff]
        %v531 = vld [vmem:[%s329 + $0x1f0] sm:$0xff]
        %v532 = vld [vmem:[%s329 + $0x1f8] sm:$0xff]
        %v597 = vunpack.c.l.b16 %v469
        %v598 = vunpack.c.h.b16 %v469
        %v599 = vunpack.c.l.b16 %v470
        %v600 = vunpack.c.h.b16 %v470
        %v601 = vunpack.c.l.b16 %v471
        %v602 = vunpack.c.h.b16 %v471
        %v603 = vunpack.c.l.b16 %v472
        %v604 = vunpack.c.h.b16 %v472
        %v605 = vunpack.c.l.b16 %v473
        %v606 = vunpack.c.h.b16 %v473
        %v607 = vunpack.c.l.b16 %v474
        %v608 = vunpack.c.h.b16 %v474
        %v609 = vunpack.c.l.b16 %v475
        %v610 = vunpack.c.h.b16 %v475
        %v611 = vunpack.c.l.b16 %v476
        %v612 = vunpack.c.h.b16 %v476
        %v613 = vunpack.c.l.b16 %v477
        %v614 = vunpack.c.h.b16 %v477
        %v615 = vunpack.c.l.b16 %v478
        %v616 = vunpack.c.h.b16 %v478
        %v617 = vunpack.c.l.b16 %v479
        %v618 = vunpack.c.h.b16 %v479
        %v619 = vunpack.c.l.b16 %v480
        %v620 = vunpack.c.h.b16 %v480
        %v621 = vunpack.c.l.b16 %v481
        %v622 = vunpack.c.h.b16 %v481
        %v623 = vunpack.c.l.b16 %v482
        %v624 = vunpack.c.h.b16 %v482
        %v625 = vunpack.c.l.b16 %v483
        %v626 = vunpack.c.h.b16 %v483
        %v627 = vunpack.c.l.b16 %v484
        %v628 = vunpack.c.h.b16 %v484
        %v629 = vunpack.c.l.b16 %v485
        %v630 = vunpack.c.h.b16 %v485
        %v631 = vunpack.c.l.b16 %v486
        %v632 = vunpack.c.h.b16 %v486
        %v633 = vunpack.c.l.b16 %v487
        %v634 = vunpack.c.h.b16 %v487
        %v635 = vunpack.c.l.b16 %v488
        %v636 = vunpack.c.h.b16 %v488
        %v637 = vunpack.c.l.b16 %v489
        %v638 = vunpack.c.h.b16 %v489
        %v639 = vunpack.c.l.b16 %v490
        %v640 = vunpack.c.h.b16 %v490
        %v641 = vunpack.c.l.b16 %v491
        %v642 = vunpack.c.h.b16 %v491
        %v643 = vunpack.c.l.b16 %v492
        %v644 = vunpack.c.h.b16 %v492
        %v645 = vunpack.c.l.b16 %v493
        %v646 = vunpack.c.h.b16 %v493
        %v647 = vunpack.c.l.b16 %v494
        %v648 = vunpack.c.h.b16 %v494
        %v649 = vunpack.c.l.b16 %v495
        %v650 = vunpack.c.h.b16 %v495
        %v651 = vunpack.c.l.b16 %v496
        %v652 = vunpack.c.h.b16 %v496
        %v653 = vunpack.c.l.b16 %v497
        %v654 = vunpack.c.h.b16 %v497
        %v655 = vunpack.c.l.b16 %v498
        %v656 = vunpack.c.h.b16 %v498
        %v657 = vunpack.c.l.b16 %v499
        %v658 = vunpack.c.h.b16 %v499
        %v659 = vunpack.c.l.b16 %v500
        %v660 = vunpack.c.h.b16 %v500
        %v661 = vunpack.c.l.b16 %v501
        %v662 = vunpack.c.h.b16 %v501
        %v663 = vunpack.c.l.b16 %v502
        %v664 = vunpack.c.h.b16 %v502
        %v665 = vunpack.c.l.b16 %v503
        %v666 = vunpack.c.h.b16 %v503
        %v667 = vunpack.c.l.b16 %v504
        %v668 = vunpack.c.h.b16 %v504
        %v669 = vunpack.c.l.b16 %v505
        %v670 = vunpack.c.h.b16 %v505
        %v671 = vunpack.c.l.b16 %v506
        %v672 = vunpack.c.h.b16 %v506
        %v673 = vunpack.c.l.b16 %v507
        %v674 = vunpack.c.h.b16 %v507
        %v675 = vunpack.c.l.b16 %v508
        %v676 = vunpack.c.h.b16 %v508
        %v677 = vunpack.c.l.b16 %v509
        %v678 = vunpack.c.h.b16 %v509
        %v679 = vunpack.c.l.b16 %v510
        %v680 = vunpack.c.h.b16 %v510
        %v681 = vunpack.c.l.b16 %v511
        %v682 = vunpack.c.h.b16 %v511
        %v683 = vunpack.c.l.b16 %v512
        %v684 = vunpack.c.h.b16 %v512
        %v685 = vunpack.c.l.b16 %v513
        %v686 = vunpack.c.h.b16 %v513
        %v687 = vunpack.c.l.b16 %v514
        %v688 = vunpack.c.h.b16 %v514
        %v689 = vunpack.c.l.b16 %v515
        %v690 = vunpack.c.h.b16 %v515
        %v691 = vunpack.c.l.b16 %v516
        %v692 = vunpack.c.h.b16 %v516
        %v693 = vunpack.c.l.b16 %v517
        %v694 = vunpack.c.h.b16 %v517
        %v695 = vunpack.c.l.b16 %v518
        %v696 = vunpack.c.h.b16 %v518
        %v697 = vunpack.c.l.b16 %v519
        %v698 = vunpack.c.h.b16 %v519
        %v699 = vunpack.c.l.b16 %v520
        %v700 = vunpack.c.h.b16 %v520
        %v701 = vunpack.c.l.b16 %v521
        %v702 = vunpack.c.h.b16 %v521
        %v703 = vunpack.c.l.b16 %v522
        %v704 = vunpack.c.h.b16 %v522
        %v705 = vunpack.c.l.b16 %v523
        %v706 = vunpack.c.h.b16 %v523
        %v707 = vunpack.c.l.b16 %v524
        %v708 = vunpack.c.h.b16 %v524
        %v709 = vunpack.c.l.b16 %v525
        %v710 = vunpack.c.h.b16 %v525
        %v711 = vunpack.c.l.b16 %v526
        %v712 = vunpack.c.h.b16 %v526
        %v713 = vunpack.c.l.b16 %v527
        %v714 = vunpack.c.h.b16 %v527
        %v715 = vunpack.c.l.b16 %v528
        %v716 = vunpack.c.h.b16 %v528
        %v717 = vunpack.c.l.b16 %v529
        %v718 = vunpack.c.h.b16 %v529
        %v719 = vunpack.c.l.b16 %v530
        %v720 = vunpack.c.h.b16 %v530
        %v721 = vunpack.c.l.b16 %v531
        %v722 = vunpack.c.h.b16 %v531
        %v723 = vunpack.c.l.b16 %v532
        %v724 = vunpack.c.h.b16 %v532
        %v725 = vpack.c.b16 %v599, %v597
        %v726 = vpack.c.b16 %v600, %v598
        %v727 = vpack.c.b16 %v603, %v601
        %v728 = vpack.c.b16 %v604, %v602
        %v729 = vpack.c.b16 %v607, %v605
        %v730 = vpack.c.b16 %v608, %v606
        %v731 = vpack.c.b16 %v611, %v609
        %v732 = vpack.c.b16 %v612, %v610
        %v733 = vpack.c.b16 %v615, %v613
        %v734 = vpack.c.b16 %v616, %v614
        %v735 = vpack.c.b16 %v619, %v617
        %v736 = vpack.c.b16 %v620, %v618
        %v737 = vpack.c.b16 %v623, %v621
        %v738 = vpack.c.b16 %v624, %v622
        %v739 = vpack.c.b16 %v627, %v625
        %v740 = vpack.c.b16 %v628, %v626
        %v741 = vpack.c.b16 %v631, %v629
        %v742 = vpack.c.b16 %v632, %v630
        %v743 = vpack.c.b16 %v635, %v633
        %v744 = vpack.c.b16 %v636, %v634
        %v745 = vpack.c.b16 %v639, %v637
        %v746 = vpack.c.b16 %v640, %v638
        %v747 = vpack.c.b16 %v643, %v641
        %v748 = vpack.c.b16 %v644, %v642
        %v749 = vpack.c.b16 %v647, %v645
        %v750 = vpack.c.b16 %v648, %v646
        %v751 = vpack.c.b16 %v651, %v649
        %v752 = vpack.c.b16 %v652, %v650
        %v753 = vpack.c.b16 %v655, %v653
        %v754 = vpack.c.b16 %v656, %v654
        %v755 = vpack.c.b16 %v659, %v657
        %v756 = vpack.c.b16 %v660, %v658
        %v757 = vpack.c.b16 %v663, %v661
        %v758 = vpack.c.b16 %v664, %v662
        %v759 = vpack.c.b16 %v667, %v665
        %v760 = vpack.c.b16 %v668, %v666
        %v761 = vpack.c.b16 %v671, %v669
        %v762 = vpack.c.b16 %v672, %v670
        %v763 = vpack.c.b16 %v675, %v673
        %v764 = vpack.c.b16 %v676, %v674
        %v765 = vpack.c.b16 %v679, %v677
        %v766 = vpack.c.b16 %v680, %v678
        %v767 = vpack.c.b16 %v683, %v681
        %v768 = vpack.c.b16 %v684, %v682
        %v769 = vpack.c.b16 %v687, %v685
        %v770 = vpack.c.b16 %v688, %v686
        %v771 = vpack.c.b16 %v691, %v689
        %v772 = vpack.c.b16 %v692, %v690
        %v773 = vpack.c.b16 %v695, %v693
        %v774 = vpack.c.b16 %v696, %v694
        %v775 = vpack.c.b16 %v699, %v697
        %v776 = vpack.c.b16 %v700, %v698
        %v777 = vpack.c.b16 %v703, %v701
        %v778 = vpack.c.b16 %v704, %v702
        %v779 = vpack.c.b16 %v707, %v705
        %v780 = vpack.c.b16 %v708, %v706
        %v781 = vpack.c.b16 %v711, %v709
        %v782 = vpack.c.b16 %v712, %v710
        %v783 = vpack.c.b16 %v715, %v713
        %v784 = vpack.c.b16 %v716, %v714
        %v785 = vpack.c.b16 %v719, %v717
        %v786 = vpack.c.b16 %v720, %v718
        %v787 = vpack.c.b16 %v723, %v721
        %v788 = vpack.c.b16 %v724, %v722
        %853 = vmatpush.bf16.msra.mxu0 %v739
        %854 = vmatpush.bf16.msra.mxu0 %v737
        %855 = vmatpush.bf16.msra.mxu0 %v735
        %856 = vmatpush.bf16.msra.mxu0 %v733
        %857 = vmatpush.bf16.msra.mxu0 %v731
        %858 = vmatpush.bf16.msra.mxu0 %v729
        %859 = vmatpush.bf16.msra.mxu0 %v727
        %860 = vmatpush.bf16.msra.mxu0 %v725
        %861 = vmatmul.bf16.gmra.mxu0 %v401
        %v862 = vpop.f32.mrf.mxu0
        %v863 = vadd.f32 0.0, %v862
        %v864 = vpop.f32.mrf.mxu0
        %865 = vdwg.mxu0
        %866 = vmatpush.bf16.msra.mxu0 %v755
        %867 = vmatpush.bf16.msra.mxu0 %v753
        %868 = vmatpush.bf16.msra.mxu0 %v751
        %869 = vmatpush.bf16.msra.mxu0 %v749
        %870 = vmatpush.bf16.msra.mxu0 %v747
        %871 = vmatpush.bf16.msra.mxu0 %v745
        %872 = vmatpush.bf16.msra.mxu0 %v743
        %873 = vmatpush.bf16.msra.mxu0 %v741
        %874 = vmatmul.bf16.gmra.mxu0 %v402
        %v875 = vpop.f32.mrf.mxu0
        %v876 = vadd.f32 %v863, %v875
        %v877 = vpop.f32.mrf.mxu0
        %878 = vdwg.mxu0
        %879 = vmatpush.bf16.msra.mxu0 %v771
        %880 = vmatpush.bf16.msra.mxu0 %v769
        %881 = vmatpush.bf16.msra.mxu0 %v767
        %882 = vmatpush.bf16.msra.mxu0 %v765
        %883 = vmatpush.bf16.msra.mxu0 %v763
        %884 = vmatpush.bf16.msra.mxu0 %v761
        %885 = vmatpush.bf16.msra.mxu0 %v759
        %886 = vmatpush.bf16.msra.mxu0 %v757
        %887 = vmatmul.bf16.gmra.mxu0 %v403
        %v888 = vpop.f32.mrf.mxu0
        %v889 = vadd.f32 %v876, %v888
        %v890 = vpop.f32.mrf.mxu0
        %891 = vdwg.mxu0
        %892 = vmatpush.bf16.msra.mxu0 %v787
        %893 = vmatpush.bf16.msra.mxu0 %v785
        %894 = vmatpush.bf16.msra.mxu0 %v783
        %895 = vmatpush.bf16.msra.mxu0 %v781
        %896 = vmatpush.bf16.msra.mxu0 %v779
        %897 = vmatpush.bf16.msra.mxu0 %v777
        %898 = vmatpush.bf16.msra.mxu0 %v775
        %899 = vmatpush.bf16.msra.mxu0 %v773
        %900 = vmatmul.bf16.gmra.mxu0 %v404
        %v901 = vpop.f32.mrf.mxu0
        %v902 = vadd.f32 %v889, %v901
        %v903 = vpop.f32.mrf.mxu0
        %904 = vdwg.mxu0
        %905 = vmatpush.bf16.msra.mxu0 %v740
        %906 = vmatpush.bf16.msra.mxu0 %v738
        %907 = vmatpush.bf16.msra.mxu0 %v736
        %908 = vmatpush.bf16.msra.mxu0 %v734
        %909 = vmatpush.bf16.msra.mxu0 %v732
        %910 = vmatpush.bf16.msra.mxu0 %v730
        %911 = vmatpush.bf16.msra.mxu0 %v728
        %912 = vmatpush.bf16.msra.mxu0 %v726
        %913 = vmatmul.bf16.gmra.mxu0 %v401
        %v914 = vpop.f32.mrf.mxu0
        %v915 = vadd.f32 0.0, %v914
        %v916 = vpop.f32.mrf.mxu0
        %917 = vdwg.mxu0
        %918 = vmatpush.bf16.msra.mxu0 %v756
        %919 = vmatpush.bf16.msra.mxu0 %v754
        %920 = vmatpush.bf16.msra.mxu0 %v752
        %921 = vmatpush.bf16.msra.mxu0 %v750
        %922 = vmatpush.bf16.msra.mxu0 %v748
        %923 = vmatpush.bf16.msra.mxu0 %v746
        %924 = vmatpush.bf16.msra.mxu0 %v744
        %925 = vmatpush.bf16.msra.mxu0 %v742
        %926 = vmatmul.bf16.gmra.mxu0 %v402
        %v927 = vpop.f32.mrf.mxu0
        %v928 = vadd.f32 %v915, %v927
        %v929 = vpop.f32.mrf.mxu0
        %930 = vdwg.mxu0
        %931 = vmatpush.bf16.msra.mxu0 %v772
        %932 = vmatpush.bf16.msra.mxu0 %v770
        %933 = vmatpush.bf16.msra.mxu0 %v768
        %934 = vmatpush.bf16.msra.mxu0 %v766
        %935 = vmatpush.bf16.msra.mxu0 %v764
        %936 = vmatpush.bf16.msra.mxu0 %v762
        %937 = vmatpush.bf16.msra.mxu0 %v760
        %938 = vmatpush.bf16.msra.mxu0 %v758
        %939 = vmatmul.bf16.gmra.mxu0 %v403
        %v940 = vpop.f32.mrf.mxu0
        %v941 = vadd.f32 %v928, %v940
        %v942 = vpop.f32.mrf.mxu0
        %943 = vdwg.mxu0
        %944 = vmatpush.bf16.msra.mxu0 %v788
        %945 = vmatpush.bf16.msra.mxu0 %v786
        %946 = vmatpush.bf16.msra.mxu0 %v784
        %947 = vmatpush.bf16.msra.mxu0 %v782
        %948 = vmatpush.bf16.msra.mxu0 %v780
        %949 = vmatpush.bf16.msra.mxu0 %v778
        %950 = vmatpush.bf16.msra.mxu0 %v776
        %951 = vmatpush.bf16.msra.mxu0 %v774
        %952 = vmatmul.bf16.gmra.mxu0 %v404
        %v953 = vpop.f32.mrf.mxu0
        %v954 = vadd.f32 %v941, %v953
        %v955 = vpop.f32.mrf.mxu0
        %956 = vdwg.mxu0
        %v1021 = vunpack.c.l.b16 %v405
        %v1022 = vunpack.c.h.b16 %v405
        %v1023 = vunpack.c.l.b16 %v406
        %v1024 = vunpack.c.h.b16 %v406
        %v1025 = vunpack.c.l.b16 %v407
        %v1026 = vunpack.c.h.b16 %v407
        %v1027 = vunpack.c.l.b16 %v408
        %v1028 = vunpack.c.h.b16 %v408
        %v1029 = vunpack.c.l.b16 %v409
        %v1030 = vunpack.c.h.b16 %v409
        %v1031 = vunpack.c.l.b16 %v410
        %v1032 = vunpack.c.h.b16 %v410
        %v1033 = vunpack.c.l.b16 %v411
        %v1034 = vunpack.c.h.b16 %v411
        %v1035 = vunpack.c.l.b16 %v412
        %v1036 = vunpack.c.h.b16 %v412
        %v1037 = vunpack.c.l.b16 %v413
        %v1038 = vunpack.c.h.b16 %v413
        %v1039 = vunpack.c.l.b16 %v414
        %v1040 = vunpack.c.h.b16 %v414
        %v1041 = vunpack.c.l.b16 %v415
        %v1042 = vunpack.c.h.b16 %v415
        %v1043 = vunpack.c.l.b16 %v416
        %v1044 = vunpack.c.h.b16 %v416
        %v1045 = vunpack.c.l.b16 %v417
        %v1046 = vunpack.c.h.b16 %v417
        %v1047 = vunpack.c.l.b16 %v418
        %v1048 = vunpack.c.h.b16 %v418
        %v1049 = vunpack.c.l.b16 %v419
        %v1050 = vunpack.c.h.b16 %v419
        %v1051 = vunpack.c.l.b16 %v420
        %v1052 = vunpack.c.h.b16 %v420
        %v1053 = vunpack.c.l.b16 %v421
        %v1054 = vunpack.c.h.b16 %v421
        %v1055 = vunpack.c.l.b16 %v422
        %v1056 = vunpack.c.h.b16 %v422
        %v1057 = vunpack.c.l.b16 %v423
        %v1058 = vunpack.c.h.b16 %v423
        %v1059 = vunpack.c.l.b16 %v424
        %v1060 = vunpack.c.h.b16 %v424
        %v1061 = vunpack.c.l.b16 %v425
        %v1062 = vunpack.c.h.b16 %v425
        %v1063 = vunpack.c.l.b16 %v426
        %v1064 = vunpack.c.h.b16 %v426
        %v1065 = vunpack.c.l.b16 %v427
        %v1066 = vunpack.c.h.b16 %v427
        %v1067 = vunpack.c.l.b16 %v428
        %v1068 = vunpack.c.h.b16 %v428
        %v1069 = vunpack.c.l.b16 %v429
        %v1070 = vunpack.c.h.b16 %v429
        %v1071 = vunpack.c.l.b16 %v430
        %v1072 = vunpack.c.h.b16 %v430
        %v1073 = vunpack.c.l.b16 %v431
        %v1074 = vunpack.c.h.b16 %v431
        %v1075 = vunpack.c.l.b16 %v432
        %v1076 = vunpack.c.h.b16 %v432
        %v1077 = vunpack.c.l.b16 %v433
        %v1078 = vunpack.c.h.b16 %v433
        %v1079 = vunpack.c.l.b16 %v434
        %v1080 = vunpack.c.h.b16 %v434
        %v1081 = vunpack.c.l.b16 %v435
        %v1082 = vunpack.c.h.b16 %v435
        %v1083 = vunpack.c.l.b16 %v436
        %v1084 = vunpack.c.h.b16 %v436
        %v1085 = vunpack.c.l.b16 %v437
        %v1086 = vunpack.c.h.b16 %v437
        %v1087 = vunpack.c.l.b16 %v438
        %v1088 = vunpack.c.h.b16 %v438
        %v1089 = vunpack.c.l.b16 %v439
        %v1090 = vunpack.c.h.b16 %v439
        %v1091 = vunpack.c.l.b16 %v440
        %v1092 = vunpack.c.h.b16 %v440
        %v1093 = vunpack.c.l.b16 %v441
        %v1094 = vunpack.c.h.b16 %v441
        %v1095 = vunpack.c.l.b16 %v442
        %v1096 = vunpack.c.h.b16 %v442
        %v1097 = vunpack.c.l.b16 %v443
        %v1098 = vunpack.c.h.b16 %v443
        %v1099 = vunpack.c.l.b16 %v444
        %v1100 = vunpack.c.h.b16 %v444
        %v1101 = vunpack.c.l.b16 %v445
        %v1102 = vunpack.c.h.b16 %v445
        %v1103 = vunpack.c.l.b16 %v446
        %v1104 = vunpack.c.h.b16 %v446
        %v1105 = vunpack.c.l.b16 %v447
        %v1106 = vunpack.c.h.b16 %v447
        %v1107 = vunpack.c.l.b16 %v448
        %v1108 = vunpack.c.h.b16 %v448
        %v1109 = vunpack.c.l.b16 %v449
        %v1110 = vunpack.c.h.b16 %v449
        %v1111 = vunpack.c.l.b16 %v450
        %v1112 = vunpack.c.h.b16 %v450
        %v1113 = vunpack.c.l.b16 %v451
        %v1114 = vunpack.c.h.b16 %v451
        %v1115 = vunpack.c.l.b16 %v452
        %v1116 = vunpack.c.h.b16 %v452
        %v1117 = vunpack.c.l.b16 %v453
        %v1118 = vunpack.c.h.b16 %v453
        %v1119 = vunpack.c.l.b16 %v454
        %v1120 = vunpack.c.h.b16 %v454
        %v1121 = vunpack.c.l.b16 %v455
        %v1122 = vunpack.c.h.b16 %v455
        %v1123 = vunpack.c.l.b16 %v456
        %v1124 = vunpack.c.h.b16 %v456
        %v1125 = vunpack.c.l.b16 %v457
        %v1126 = vunpack.c.h.b16 %v457
        %v1127 = vunpack.c.l.b16 %v458
        %v1128 = vunpack.c.h.b16 %v458
        %v1129 = vunpack.c.l.b16 %v459
        %v1130 = vunpack.c.h.b16 %v459
        %v1131 = vunpack.c.l.b16 %v460
        %v1132 = vunpack.c.h.b16 %v460
        %v1133 = vunpack.c.l.b16 %v461
        %v1134 = vunpack.c.h.b16 %v461
        %v1135 = vunpack.c.l.b16 %v462
        %v1136 = vunpack.c.h.b16 %v462
        %v1137 = vunpack.c.l.b16 %v463
        %v1138 = vunpack.c.h.b16 %v463
        %v1139 = vunpack.c.l.b16 %v464
        %v1140 = vunpack.c.h.b16 %v464
        %v1141 = vunpack.c.l.b16 %v465
        %v1142 = vunpack.c.h.b16 %v465
        %v1143 = vunpack.c.l.b16 %v466
        %v1144 = vunpack.c.h.b16 %v466
        %v1145 = vunpack.c.l.b16 %v467
        %v1146 = vunpack.c.h.b16 %v467
        %v1147 = vunpack.c.l.b16 %v468
        %v1148 = vunpack.c.h.b16 %v468
        %v1149 = vpack.c.b16 %v1023, %v1021
        %v1150 = vpack.c.b16 %v1024, %v1022
        %v1151 = vpack.c.b16 %v1027, %v1025
        %v1152 = vpack.c.b16 %v1028, %v1026
        %v1153 = vpack.c.b16 %v1031, %v1029
        %v1154 = vpack.c.b16 %v1032, %v1030
        %v1155 = vpack.c.b16 %v1035, %v1033
        %v1156 = vpack.c.b16 %v1036, %v1034
        %v1157 = vpack.c.b16 %v1039, %v1037
        %v1158 = vpack.c.b16 %v1040, %v1038
        %v1159 = vpack.c.b16 %v1043, %v1041
        %v1160 = vpack.c.b16 %v1044, %v1042
        %v1161 = vpack.c.b16 %v1047, %v1045
        %v1162 = vpack.c.b16 %v1048, %v1046
        %v1163 = vpack.c.b16 %v1051, %v1049
        %v1164 = vpack.c.b16 %v1052, %v1050
        %v1165 = vpack.c.b16 %v1055, %v1053
        %v1166 = vpack.c.b16 %v1056, %v1054
        %v1167 = vpack.c.b16 %v1059, %v1057
        %v1168 = vpack.c.b16 %v1060, %v1058
        %v1169 = vpack.c.b16 %v1063, %v1061
        %v1170 = vpack.c.b16 %v1064, %v1062
        %v1171 = vpack.c.b16 %v1067, %v1065
        %v1172 = vpack.c.b16 %v1068, %v1066
        %v1173 = vpack.c.b16 %v1071, %v1069
        %v1174 = vpack.c.b16 %v1072, %v1070
        %v1175 = vpack.c.b16 %v1075, %v1073
        %v1176 = vpack.c.b16 %v1076, %v1074
        %v1177 = vpack.c.b16 %v1079, %v1077
        %v1178 = vpack.c.b16 %v1080, %v1078
        %v1179 = vpack.c.b16 %v1083, %v1081
        %v1180 = vpack.c.b16 %v1084, %v1082
        %v1181 = vpack.c.b16 %v1087, %v1085
        %v1182 = vpack.c.b16 %v1088, %v1086
        %v1183 = vpack.c.b16 %v1091, %v1089
        %v1184 = vpack.c.b16 %v1092, %v1090
        %v1185 = vpack.c.b16 %v1095, %v1093
        %v1186 = vpack.c.b16 %v1096, %v1094
        %v1187 = vpack.c.b16 %v1099, %v1097
        %v1188 = vpack.c.b16 %v1100, %v1098
        %v1189 = vpack.c.b16 %v1103, %v1101
        %v1190 = vpack.c.b16 %v1104, %v1102
        %v1191 = vpack.c.b16 %v1107, %v1105
        %v1192 = vpack.c.b16 %v1108, %v1106
        %v1193 = vpack.c.b16 %v1111, %v1109
        %v1194 = vpack.c.b16 %v1112, %v1110
        %v1195 = vpack.c.b16 %v1115, %v1113
        %v1196 = vpack.c.b16 %v1116, %v1114
        %v1197 = vpack.c.b16 %v1119, %v1117
        %v1198 = vpack.c.b16 %v1120, %v1118
        %v1199 = vpack.c.b16 %v1123, %v1121
        %v1200 = vpack.c.b16 %v1124, %v1122
        %v1201 = vpack.c.b16 %v1127, %v1125
        %v1202 = vpack.c.b16 %v1128, %v1126
        %v1203 = vpack.c.b16 %v1131, %v1129
        %v1204 = vpack.c.b16 %v1132, %v1130
        %v1205 = vpack.c.b16 %v1135, %v1133
        %v1206 = vpack.c.b16 %v1136, %v1134
        %v1207 = vpack.c.b16 %v1139, %v1137
        %v1208 = vpack.c.b16 %v1140, %v1138
        %v1209 = vpack.c.b16 %v1143, %v1141
        %v1210 = vpack.c.b16 %v1144, %v1142
        %v1211 = vpack.c.b16 %v1147, %v1145
        %v1212 = vpack.c.b16 %v1148, %v1146
        %1277 = vmatpush.bf16.msra.mxu0 %v1163
        %1278 = vmatpush.bf16.msra.mxu0 %v1161
        %1279 = vmatpush.bf16.msra.mxu0 %v1159
        %1280 = vmatpush.bf16.msra.mxu0 %v1157
        %1281 = vmatpush.bf16.msra.mxu0 %v1155
        %1282 = vmatpush.bf16.msra.mxu0 %v1153
        %1283 = vmatpush.bf16.msra.mxu0 %v1151
        %1284 = vmatpush.bf16.msra.mxu0 %v1149
        %1285 = vmatmul.bf16.gmra.mxu0 %v393
        %v1286 = vpop.f32.mrf.mxu0
        %v1287 = vadd.f32 %v902, %v1286
        %v1288 = vpop.f32.mrf.mxu0
        %1289 = vdwg.mxu0
        %1290 = vmatpush.bf16.msra.mxu0 %v1179
        %1291 = vmatpush.bf16.msra.mxu0 %v1177
        %1292 = vmatpush.bf16.msra.mxu0 %v1175
        %1293 = vmatpush.bf16.msra.mxu0 %v1173
        %1294 = vmatpush.bf16.msra.mxu0 %v1171
        %1295 = vmatpush.bf16.msra.mxu0 %v1169
        %1296 = vmatpush.bf16.msra.mxu0 %v1167
        %1297 = vmatpush.bf16.msra.mxu0 %v1165
        %1298 = vmatmul.bf16.gmra.mxu0 %v394
        %v1299 = vpop.f32.mrf.mxu0
        %v1300 = vadd.f32 %v1287, %v1299
        %v1301 = vpop.f32.mrf.mxu0
        %1302 = vdwg.mxu0
        %1303 = vmatpush.bf16.msra.mxu0 %v1195
        %1304 = vmatpush.bf16.msra.mxu0 %v1193
        %1305 = vmatpush.bf16.msra.mxu0 %v1191
        %1306 = vmatpush.bf16.msra.mxu0 %v1189
        %1307 = vmatpush.bf16.msra.mxu0 %v1187
        %1308 = vmatpush.bf16.msra.mxu0 %v1185
        %1309 = vmatpush.bf16.msra.mxu0 %v1183
        %1310 = vmatpush.bf16.msra.mxu0 %v1181
        %1311 = vmatmul.bf16.gmra.mxu0 %v395
        %v1312 = vpop.f32.mrf.mxu0
        %v1313 = vadd.f32 %v1300, %v1312
        %v1314 = vpop.f32.mrf.mxu0
        %1315 = vdwg.mxu0
        %1316 = vmatpush.bf16.msra.mxu0 %v1211
        %1317 = vmatpush.bf16.msra.mxu0 %v1209
        %1318 = vmatpush.bf16.msra.mxu0 %v1207
        %1319 = vmatpush.bf16.msra.mxu0 %v1205
        %1320 = vmatpush.bf16.msra.mxu0 %v1203
        %1321 = vmatpush.bf16.msra.mxu0 %v1201
        %1322 = vmatpush.bf16.msra.mxu0 %v1199
        %1323 = vmatpush.bf16.msra.mxu0 %v1197
        %1324 = vmatmul.bf16.gmra.mxu0 %v396
        %v1325 = vpop.f32.mrf.mxu0
        %v1326 = vadd.f32 %v1313, %v1325
        %v1327 = vpop.f32.mrf.mxu0
        %1328 = vdwg.mxu0
        %1329 = vmatpush.bf16.msra.mxu0 %v1164
        %1330 = vmatpush.bf16.msra.mxu0 %v1162
        %1331 = vmatpush.bf16.msra.mxu0 %v1160
        %1332 = vmatpush.bf16.msra.mxu0 %v1158
        %1333 = vmatpush.bf16.msra.mxu0 %v1156
        %1334 = vmatpush.bf16.msra.mxu0 %v1154
        %1335 = vmatpush.bf16.msra.mxu0 %v1152
        %1336 = vmatpush.bf16.msra.mxu0 %v1150
        %1337 = vmatmul.bf16.gmra.mxu0 %v393
        %v1338 = vpop.f32.mrf.mxu0
        %v1339 = vadd.f32 %v954, %v1338
        %v1340 = vpop.f32.mrf.mxu0
        %1341 = vdwg.mxu0
        %1342 = vmatpush.bf16.msra.mxu0 %v1180
        %1343 = vmatpush.bf16.msra.mxu0 %v1178
        %1344 = vmatpush.bf16.msra.mxu0 %v1176
        %1345 = vmatpush.bf16.msra.mxu0 %v1174
        %1346 = vmatpush.bf16.msra.mxu0 %v1172
        %1347 = vmatpush.bf16.msra.mxu0 %v1170
        %1348 = vmatpush.bf16.msra.mxu0 %v1168
        %1349 = vmatpush.bf16.msra.mxu0 %v1166
        %1350 = vmatmul.bf16.gmra.mxu0 %v394
        %v1351 = vpop.f32.mrf.mxu0
        %v1352 = vadd.f32 %v1339, %v1351
        %v1353 = vpop.f32.mrf.mxu0
        %1354 = vdwg.mxu0
        %1355 = vmatpush.bf16.msra.mxu0 %v1196
        %1356 = vmatpush.bf16.msra.mxu0 %v1194
        %1357 = vmatpush.bf16.msra.mxu0 %v1192
        %1358 = vmatpush.bf16.msra.mxu0 %v1190
        %1359 = vmatpush.bf16.msra.mxu0 %v1188
        %1360 = vmatpush.bf16.msra.mxu0 %v1186
        %1361 = vmatpush.bf16.msra.mxu0 %v1184
        %1362 = vmatpush.bf16.msra.mxu0 %v1182
        %1363 = vmatmul.bf16.gmra.mxu0 %v395
        %v1364 = vpop.f32.mrf.mxu0
        %v1365 = vadd.f32 %v1352, %v1364
        %v1366 = vpop.f32.mrf.mxu0
        %1367 = vdwg.mxu0
        %1368 = vmatpush.bf16.msra.mxu0 %v1212
        %1369 = vmatpush.bf16.msra.mxu0 %v1210
        %1370 = vmatpush.bf16.msra.mxu0 %v1208
        %1371 = vmatpush.bf16.msra.mxu0 %v1206
        %1372 = vmatpush.bf16.msra.mxu0 %v1204
        %1373 = vmatpush.bf16.msra.mxu0 %v1202
        %1374 = vmatpush.bf16.msra.mxu0 %v1200
        %1375 = vmatpush.bf16.msra.mxu0 %v1198
        %1376 = vmatmul.bf16.gmra.mxu0 %v396
        %v1377 = vpop.f32.mrf.mxu0
        %v1378 = vadd.f32 %v1365, %v1377
        %v1379 = vpop.f32.mrf.mxu0
        %1380 = vdwg.mxu0
        %v1381 = vld [vmem:[%s339] sm:$0x3]
        %v1383 = vperm.slane %v1381, 0
        %v1384 = vperm.slane %v1381, 1
        %v1387 = vadd.f32 %v1326, %v1383
        %v1388 = vadd.f32 %v1378, %v1384
        %1389 = vst [vmem:[%s376] sm:$0xff] %v1387
        %1390 = vst [vmem:[%s376 + $0x8] sm:$0xff] %v1388
        %s1391 = sand.u32 %s173, 1
        %s1392 = scalar_lea.sflag [#allocation4], %s1391
        %s1393 = sand.u32 %s173, 1
        %s1394 = smul.addr %s1393, 16
        %s1395 = scalar_lea.vmem [#allocation10], %s1394
        // Predicated region
        $region61: #{tpu_custom_call.1} parent=39 // pred_check
          %p1396 = pneg %p183
        $region62: #{tpu_custom_call.1} parent=39 // pred_check_branch
          %1398 = sbr.rel (%p1396) target = $region64
        $region63: #{tpu_custom_call.1} parent=39 // pred_region
          %s1399 = smul.u32 2, %s26
          %1401 = vsyncadd %s1392, 0
          %s1402 = smul.addr %s25, 4
          %s1403 = sadd.s32 %s1399, %s1402
          %s1404 = smul.addr %s1403, 8
          %s1405 = scalar_lea.hbm %s5, %s1404
          %s1407 = sshll.u32 %s1395, 4
          %s1408 = int_to_ptr.vmem [resolvable:$true] %s1407
          %s1409 = sshll.u32 %s1405, 4
          %s1410 = int_to_ptr.hbm [resolvable:$true] %s1409
          %1412 = dma.vmem_to_hbm [thread:$0]  %s1408, 256, %s1410, %s1392
        $region64: #{tpu_custom_call.1} parent=39 // pred_fallthru
          _
      $region40: #{tpu_custom_call.1} parent=5 // pred_fallthru
        _
      %p1413 = scmp.le.s32.totalorder 2, %s16
      // Predicated region
      $region65: #{tpu_custom_call.1} parent=5 // pred_check
        %p1414 = pneg %p1413
      $region66: #{tpu_custom_call.1} parent=5 // pred_check_branch
        %1416 = sbr.rel (%p1414) target = $region68
      $region67: #{tpu_custom_call.1} parent=5 // pred_region
        %s1417 = ssub.s32 %s16, 2
        // Predicated region
        $region69: #{tpu_custom_call.1} parent=67 // pred_check
          %p1418 = pneg %p189
        $region70: #{tpu_custom_call.1} parent=67 // pred_check_branch
          %1420 = sbr.rel (%p1418) target = $region72
        $region71: #{tpu_custom_call.1} parent=67 // pred_region
          %s1421 = sand.u32 %s174, 1
          %s1422 = scalar_lea.sflag [#allocation4], %s1421
          %s1423 = sand.u32 %s174, 1
          %s1424 = smul.addr %s1423, 16
          %s1425 = scalar_lea.vmem [#allocation10], %s1424
          %1427 = dma.done %s1422, 256
        $region72: #{tpu_custom_call.1} parent=67 // pred_fallthru
          _
      $region68: #{tpu_custom_call.1} parent=5 // pred_fallthru
        _
    $region6: #{tpu_custom_call.1} parent=1 // loop_footer
      %s20 = sadd.s32 1, %s16
    $region7: #{tpu_custom_call.1} parent=1 // loop_footer_branch
      %15 = sbr.rel target = $region3
    $region8: #{tpu_custom_call.1} parent=1 // loop_exit
      _
    %1428 = vsyncpa [#allocation3], 1
    %s1429 = scalar_lea.sflag [#allocation3], 1
    %1430 = vsyncpa %s1429, 1
    %1431 = vsyncpa [#allocation6], 1
    %1432 = vsyncpa [#allocation4], 1
    %s1433 = scalar_lea.sflag [#allocation4], 1
    %1434 = vsyncpa %s1433, 1

</llo_original>
